<compile_context>
chip_gen: v6e
topology: v6e:2x2x1
jax: 0.10.0
libtpu: 0.0.40
codegen_flags: <defaults>
</compile_context>

<pallas_src>
import jax
import jax.numpy as jnp
from jax import lax
from jax.experimental import pallas as pl
from jax.experimental.pallas import tpu as pltpu


def _decoder_kernel(x_ref, w_ref, b_ref, o_ref):
    # x_ref : (ts, K)  bf16   activation rows (batch-major, (b, s) order)
    # w_ref : (tn, K)  bf16   weight slab, nn.Linear layout (ntoken, ninp)
    # b_ref : (1, tn)  f32    bias slab
    # o_ref : (ts, tn)        output tile of the (B*S, ntoken) result
    acc = lax.dot_general(
        x_ref[...], w_ref[...],
        dimension_numbers=(((1,), (1,)), ((), ())),   # x @ W^T on the MXU
        preferred_element_type=jnp.float32,
    )
    o_ref[...] = (acc + b_ref[...]).astype(o_ref.dtype)


def _tile_footprint_bytes(ts, tn, k, out_bytes):
    # Double-buffered input/output tiles (Pallas' default pipelining depth).
    return 2 * (ts * k * 2 + tn * k * 2 + ts * tn * out_bytes + tn * 4)


def decoder_forward(inp, weight, bias, *, tile_s=512, tile_n=2048,
                    out_dtype=jnp.float32):
    """inp: (S, B, ninp); weight: (ntoken, ninp); bias: (ntoken,).

    Returns (B, S, ntoken) == Linear(weight, bias)(inp).permute(1, 0, 2).
    """
    S, B, K = inp.shape
    N, K2 = weight.shape
    assert K2 == K and bias.shape == (N,)
    M = B * S
    out_bytes = jnp.dtype(out_dtype).itemsize

    # ---- tile selection ---------------------------------------------------
    # Block dims must be (8,128)-aligned or equal to the full array dim.
    ts = tile_s if M > tile_s else M
    tn = tile_n if N > tile_n else N
    # Shrink until the double-buffered footprint fits a conservative budget
    # (v7x has only 64 MiB VMEM per TensorCore).
    vmem_budget = 40 * 1024 * 1024
    while _tile_footprint_bytes(ts, tn, K, out_bytes) > vmem_budget:
        if tn >= 256 and tn % 128 == 0:
            tn //= 2            # stays a multiple of 128
        elif ts >= 32 and ts % 8 == 0:
            ts //= 2            # stays a multiple of 8
        else:
            break
    footprint = _tile_footprint_bytes(ts, tn, K, out_bytes)
    vmem_limit = int(min(max(footprint + 8 * 1024 * 1024, 32 * 1024 * 1024),
                         96 * 1024 * 1024))

    # ---- operand prep (fusible into the pallas_call input DMAs) ------------
    x = inp.astype(jnp.bfloat16).transpose(1, 0, 2).reshape(M, K)  # (B*S, K)
    w = weight.astype(jnp.bfloat16)                                # (N, K)
    b2 = bias.astype(jnp.float32).reshape(1, N)                    # (1, N)

    grid = (pl.cdiv(N, tn), pl.cdiv(M, ts))        # (vocab tiles, row tiles)

    out = pl.pallas_call(
        _decoder_kernel,
        out_shape=jax.ShapeDtypeStruct((M, N), out_dtype),
        grid=grid,
        in_specs=[
            # activations: re-streamed per vocab tile
            pl.BlockSpec((ts, K), lambda ni, mi: (mi, 0)),
            # weight slab: resident across the inner row-tile sweep
            pl.BlockSpec((tn, K), lambda ni, mi: (ni, 0)),
            # bias slab
            pl.BlockSpec((1, tn), lambda ni, mi: (0, ni)),
        ],
        # fused permute: rows are already (b, s)-major, lane-dense vocab tiles
        out_specs=pl.BlockSpec((ts, tn), lambda ni, mi: (mi, ni)),
        compiler_params=pltpu.CompilerParams(
            dimension_semantics=("parallel", "parallel"),
            vmem_limit_bytes=vmem_limit,
            allow_input_fusion=[True, True, True],
        ),
    )(x, w, b2)

    # Metadata-only reshape (rows already ordered (b, s)) -> (B, S, ntoken).
    return out.reshape(B, S, N)


if __name__ == "__main__":
    # Small shapes consistent with the module: seq=8, batch=2, ninp=32, ntoken=64
    S, B, ninp, ntoken = 8, 2, 32, 64

    key = jax.random.PRNGKey(0)
    k_inp, k_w = jax.random.split(key)

    inp = jax.random.normal(k_inp, (S, B, ninp), dtype=jnp.float32)

    # Deterministic parameter init mirroring Decoder.init_weights():
    #   weight ~ U(-0.1, 0.1), bias = 0
    initrange = 0.1
    weight = jax.random.uniform(
        k_w, (ntoken, ninp), dtype=jnp.float32,
        minval=-initrange, maxval=initrange)
    bias = jnp.zeros((ntoken,), dtype=jnp.float32)

    fwd = jax.jit(decoder_forward)
    out = jax.block_until_ready(fwd(inp, weight, bias))

    # Reference: same bf16 operand rounding, f32 accumulation, then permute.
    x32 = inp.astype(jnp.bfloat16).astype(jnp.float32)
    w32 = weight.astype(jnp.bfloat16).astype(jnp.float32)
    ref = (jnp.einsum("sbk,nk->sbn", x32, w32,
                      preferred_element_type=jnp.float32)
           + bias).transpose(1, 0, 2)

    assert out.shape == (B, S, ntoken), out.shape
    assert jnp.allclose(out, ref, atol=1e-4, rtol=1e-4), \
        float(jnp.abs(out - ref).max())

    print("KERNEL_OK")
</pallas_src>

<mosaic_0001>
module attributes {stable_mosaic.version = 11 : i64} {
  func.func @_decoder_kernel(%arg0: i32, %arg1: i32, %arg2: memref<16x32xbf16, #tpu.memory_space<vmem>>, %arg3: memref<64x32xbf16, #tpu.memory_space<vmem>>, %arg4: memref<1x64xf32, #tpu.memory_space<vmem>>, %arg5: memref<16x64xf32, #tpu.memory_space<vmem>>) attributes {dimension_semantics = [#tpu.dimension_semantics<parallel>, #tpu.dimension_semantics<parallel>], iteration_bounds = array<i64: 1, 1>, scalar_prefetch = 0 : i64, scratch_operands = 0 : i64, tpu.core_type = #tpu.core_type<tc>, window_params = [{transform_indices = @transform_0, window_bounds = array<i64: 16, 32>}, {transform_indices = @transform_1, window_bounds = array<i64: 64, 32>}, {transform_indices = @transform_2, window_bounds = array<i64: 1, 64>}, {transform_indices = @transform_3, window_bounds = array<i64: 16, 64>}]} {
    %c0 = arith.constant 0 : index
    %c0_0 = arith.constant 0 : index
    %0 = vector.load %arg2[%c0, %c0_0] : memref<16x32xbf16, #tpu.memory_space<vmem>>, vector<16x32xbf16>
    %c0_1 = arith.constant 0 : index
    %c0_2 = arith.constant 0 : index
    %1 = vector.load %arg3[%c0_1, %c0_2] : memref<64x32xbf16, #tpu.memory_space<vmem>>, vector<64x32xbf16>
    %cst = arith.constant dense<0.000000e+00> : vector<16x64xf32>
    %2 = tpu.matmul %0, %1, %cst {dimension_numbers = #tpu.dot_dimension_numbers<[1], [1], [0], [0], [0, 0, 1, 0], [], []>} : vector<16x32xbf16>, vector<64x32xbf16>, vector<16x64xf32> -> vector<16x64xf32>
    %c0_3 = arith.constant 0 : index
    %c0_4 = arith.constant 0 : index
    %3 = vector.load %arg4[%c0_3, %c0_4] : memref<1x64xf32, #tpu.memory_space<vmem>>, vector<1x64xf32>
    %4 = vector.broadcast %3 : vector<1x64xf32> to vector<16x64xf32>
    %5 = arith.addf %2, %4 : vector<16x64xf32>
    %c0_5 = arith.constant 0 : index
    %c0_6 = arith.constant 0 : index
    %6 = vector.load %arg5[%c0_5, %c0_6] : memref<16x64xf32, #tpu.memory_space<vmem>>, vector<16x64xf32>
    tpu.vector_store %arg5[%c0_5, %c0_6], %5 {strides = array<i32>} : memref<16x64xf32, #tpu.memory_space<vmem>>, vector<16x64xf32>,
    return
  }
  func.func @transform_0(%arg0: i32, %arg1: i32) -> (i32, i32) {
    %c0_i32 = arith.constant 0 : i32
    %c0_i32_0 = arith.constant 0 : i32
    return %arg1, %c0_i32 : i32, i32
  }
  func.func @transform_1(%arg0: i32, %arg1: i32) -> (i32, i32) {
    %c0_i32 = arith.constant 0 : i32
    %c0_i32_0 = arith.constant 0 : i32
    return %arg0, %c0_i32 : i32, i32
  }
  func.func @transform_2(%arg0: i32, %arg1: i32) -> (i32, i32) {
    %c0_i32 = arith.constant 0 : i32
    %c0_i32_0 = arith.constant 0 : i32
    return %c0_i32, %arg0 : i32, i32
  }
  func.func @transform_3(%arg0: i32, %arg1: i32) -> (i32, i32) {
    %c0_i32 = arith.constant 0 : i32
    return %arg1, %arg0 : i32, i32
  }
}

</mosaic_0001>

<llo_original>
// kernel: decoder_forward.2
$region0: #{decoder_forward.2}
  #allocation0 [shape = 'u32[]', space=smem, size = 0x4, offset = 0x4, fixed_abs, tag = 'smem constant byte address 0x4 - core index']
  #allocation1 [shape = 'u32[144,128]{1,0:T(1,128)}', space=vmem, size = 0x12000, scoped, tag = 'internal scratch']
  %s0 = inlined_call_operand.vmem [shape: bf16[64,32], index: 0, kind: input, shape index: {}]
  %s1 = inlined_call_operand.vmem [shape: bf16[2,8,32], index: 1, kind: input, shape index: {}]
  %s2 = inlined_call_operand.vmem [shape: f32[64], index: 2, kind: input, shape index: {}]
  %s3 = inlined_call_operand.hbm [shape: f32[16,64], index: 3, kind: output, shape index: {}]
  %s4 = sld [smem:[#allocation0]]
  $region22: #{decoder_forward.2} parent=0
    _
  %s6 = ssub.s32 1, %s4
  %s7 = scalar_select 0, %s6, %s4
  $region1: #{decoder_forward.2} parent=0
    #allocation2 [shape = 'u8[8192]{0}', space=vmem, size = 0x2000, scoped, tag = 'output window, operand 0, single buffered']
    #allocation3 [shape = 's32[1]{0}', space=sflag, size = 0x4, scoped, tag = 'scoped memory for decoder_forward.2']
    #allocation4 [shape = 'u8[4096]{0}', space=vmem, size = 0x1000, dematerialized = true, scoped, tag = 'FusionAdapter Buffer %fusion.1 = bf16[16,32]{1,0:T(8,128)(2,1)} fusion(%param_1.2), kind=kLoop, calls=%fused_computation.1.clone, metadata={op_name="jit(decoder_forward)/reshape" stack_frame_id=7}']
    #allocation5 [shape = 'u8[512]{0}', space=vmem, size = 0x400, dematerialized = true, scoped, tag = 'FusionAdapter Buffer %fusion.2 = f32[1,64]{1,0:T(1,128)} fusion(%param_2.2), kind=kLoop, calls=%fused_computation.3.clone, metadata={op_name="jit(decoder_forward)/reshape" stack_frame_id=9}']
    %8 = vsyncpa [#allocation3], 0
    // Predicated region
    $region2: #{decoder_forward.2} parent=1 // pred_check
      _
    $region3: #{decoder_forward.2} parent=1 // pred_check_branch
      %10 = sbr.rel (0) target = $region5
    $region4: #{decoder_forward.2} parent=1 // pred_region
      _
    $region5: #{decoder_forward.2} parent=1 // pred_fallthru
      _
    // Predicated region
    $region6: #{decoder_forward.2} parent=1 // pred_check
      _
    $region7: #{decoder_forward.2} parent=1 // pred_check_branch
      %12 = sbr.rel (0) target = $region9
    $region8: #{decoder_forward.2} parent=1 // pred_region
      _
    $region9: #{decoder_forward.2} parent=1 // pred_fallthru
      _
    // Predicated region
    $region10: #{decoder_forward.2} parent=1 // pred_check
      _
    $region11: #{decoder_forward.2} parent=1 // pred_check_branch
      %14 = sbr.rel (0) target = $region13
    $region12: #{decoder_forward.2} parent=1 // pred_region
      _
    $region13: #{decoder_forward.2} parent=1 // pred_fallthru
      _
    %v15 = vld [vmem:[%s1] sm:$0xf]
    %v16 = vunpack.c.l.bf16 %v15
    %v17 = vunpack.c.h.bf16 %v15
    %v18 = vpack.c.bf16 0.0, %v16
    %s20 = ssub.s32 16, 1
    %21 = vst [vmem:[#allocation4] sm:%s20] %v18
    %s22 = scalar_lea.vmem %s1, 4
    %v23 = vld [vmem:[%s22] sm:$0xf]
    %v24 = vunpack.c.l.bf16 %v23
    %v25 = vunpack.c.h.bf16 %v23
    %s26 = scalar_lea.vmem [#allocation4], 4
    %v27 = vpack.c.bf16 0.0, %v24
    %s29 = ssub.s32 16, 1
    %30 = vst [vmem:[%s26] sm:%s29] %v27
    %v31 = vld [vmem:[%s2] sm:$0x1]
    %s33 = ssub.s32 2, 1
    %34 = vst [vmem:[#allocation5] sm:%s33] %v31
    %v36 = vld [vmem:[#allocation4] sm:$0xf]
    %v37 = vld [vmem:[#allocation4 + $0x4] sm:$0xf]
    %v38 = vld [vmem:[%s0] sm:$0xf]
    %v39 = vld [vmem:[%s0 + $0x4] sm:$0xf]
    %v40 = vld [vmem:[%s0 + $0x8] sm:$0xf]
    %v41 = vld [vmem:[%s0 + $0xc] sm:$0xf]
    %v42 = vld [vmem:[%s0 + $0x10] sm:$0xf]
    %v43 = vld [vmem:[%s0 + $0x14] sm:$0xf]
    %v44 = vld [vmem:[%s0 + $0x18] sm:$0xf]
    %v45 = vld [vmem:[%s0 + $0x1c] sm:$0xf]
    %v46 = vld [vmem:[#allocation5] sm:$0x1]
    %v48 = vlaneseq
    %v49 = vshrl.u32 %v48, 7
    %v50 = vsub.s32 0, %v49
    %v51 = vrot.slane %v46, %v50
    %v55 = vunpack.c.l.b16 %v36
    %v56 = vunpack.c.l.b16 %v37
    %v57 = vpack.c.b16 %v56, %v55
    %v66 = vunpack.c.l.b16 %v38
    %v67 = vunpack.c.l.b16 %v39
    %v68 = vunpack.c.l.b16 %v40
    %v69 = vunpack.c.l.b16 %v41
    %v70 = vunpack.c.l.b16 %v42
    %v71 = vunpack.c.l.b16 %v43
    %v72 = vunpack.c.l.b16 %v44
    %v73 = vunpack.c.l.b16 %v45
    %v74 = vpack.c.b16 %v67, %v66
    %v75 = vpack.c.b16 %v69, %v68
    %v76 = vpack.c.b16 %v71, %v70
    %v77 = vpack.c.b16 %v73, %v72
    %vm78 = vcmask 261120
    %v80 = vsel %vm78, %v57, 0
    %v83 = vsel %vm78, %v74, 0
    %v86 = vsel %vm78, %v75, 0
    %v89 = vsel %vm78, %v76, 0
    %v92 = vsel %vm78, %v77, 0
    %94 = vmatprep.subr.bf16.mxu0 0
    %95 = vmatpush1.bf16.xpose.msra.mxu0 0
    %96 = vmatprep.subr.bf16.mxu0 0
    %97 = vmatpush1.bf16.xpose.msra.mxu0 0
    %98 = vmatprep.subr.bf16.mxu0 0
    %99 = vmatpush1.bf16.xpose.msra.mxu0 0
    %100 = vmatprep.subr.bf16.mxu0 0
    %101 = vmatpush1.bf16.xpose.msra.mxu0 0
    %102 = vmatprep.subr.bf16.mxu0 0
    %103 = vmatpush1.bf16.xpose.msra.mxu0 %v92
    %104 = vmatprep.subr.bf16.mxu0 0
    %105 = vmatpush1.bf16.xpose.msra.mxu0 %v89
    %106 = vmatprep.subr.bf16.mxu0 0
    %107 = vmatpush1.bf16.xpose.msra.mxu0 %v86
    %108 = vmatprep.subr.bf16.mxu0 0
    %109 = vmatpush1.bf16.xpose.msra.mxu0 %v83
    %110 = vmatprep.subr.bf16.mxu0 0
    %111 = vmatpush2.bf16.xpose.msra.mxu0 0
    %112 = vmatprep.subr.bf16.mxu0 0
    %113 = vmatpush2.bf16.xpose.msra.mxu0 0
    %114 = vmatprep.subr.bf16.mxu0 0
    %115 = vmatpush2.bf16.xpose.msra.mxu0 0
    %116 = vmatprep.subr.bf16.mxu0 0
    %117 = vmatpush2.bf16.xpose.msra.mxu0 0
    %118 = vmatprep.subr.bf16.mxu0 0
    %119 = vmatpush2.bf16.xpose.msra.mxu0 0
    %120 = vmatprep.subr.bf16.mxu0 0
    %121 = vmatpush2.bf16.xpose.msra.mxu0 0
    %122 = vmatprep.subr.bf16.mxu0 0
    %123 = vmatpush2.bf16.xpose.msra.mxu0 0
    %124 = vmatprep.subr.bf16.mxu0 0
    %125 = vmatpush2.bf16.xpose.msra.mxu0 0
    %126 = vmatprep.mubr.bf16.mxu0 0
    %127 = vmatmul.mubr.bf16.gmra.mxu0 %v80
    %v128 = vpop.f32.mrf.mxu0
    %v129 = vadd.f32 %v51, %v128
    %v130 = vpop.f32.mrf.mxu0
    %v131 = vpop.f32.mrf.mxu0
    %v132 = vadd.f32 %v51, %v131
    %v133 = vpop.f32.mrf.mxu0
    %134 = vdwg.mxu0
    %vm135 = vcmask 523264
    %136 = vst.msk [vmem:[#allocation2] sm:$0xff] %vm135, %v129
    %137 = vst.msk [vmem:[#allocation2 + $0x8] sm:$0xff] %vm135, %v132
    // Predicated region
    $region14: #{decoder_forward.2} parent=1 // pred_check
      _
    $region15: #{decoder_forward.2} parent=1 // pred_check_branch
      %139 = sbr.rel (0) target = $region17
    $region16: #{decoder_forward.2} parent=1 // pred_region
      %s141 = ssub.s32 256, 256
      %142 = vsyncadd [#allocation3], %s141
      %s143 = sshll.u32 [#allocation2], 4
      %s144 = int_to_ptr.vmem [resolvable:$true] %s143
      %149 = dma.vmem_to_hbm [thread:$0]  %s144, 256, %s3, [#allocation3], 128, 128, 8
    $region17: #{decoder_forward.2} parent=1 // pred_fallthru
      _
    // Predicated region
    $region18: #{decoder_forward.2} parent=1 // pred_check
      _
    $region19: #{decoder_forward.2} parent=1 // pred_check_branch
      %151 = sbr.rel (0) target = $region21
    $region20: #{decoder_forward.2} parent=1 // pred_region
      %152 = dma.done [#allocation3], 256
    $region21: #{decoder_forward.2} parent=1 // pred_fallthru
      _
    %153 = vsyncpa [#allocation3], 1

</llo_original>
